<compile_context>
chip_gen: v7x
topology: tpu7x:2x2x1
jax: 0.10.0
libtpu: 0.0.40
codegen_flags: <defaults>
</compile_context>

<pallas_src>
import functools

import jax
import jax.numpy as jnp
from jax.experimental import pallas as pl
from jax.experimental.pallas import tpu as pltpu

LANE = 128        # lane width
ALIGN_B = 16      # batch-tile alignment (safe for bf16 sublane packing)
ALIGN_S = 8       # state-dim alignment (f32 sublane)
MAX_TILE_B = 1024 # max batch rows per grid step (per perf review sweep)


def _round_up(n, m):
    return ((n + m - 1) // m) * m


def _pad2d(a, rows, cols):
    return jnp.pad(a, ((0, rows - a.shape[0]), (0, cols - a.shape[1])))


def _choose_tile_b(batch):
    """One tile for tiny batches; otherwise >=2 balanced steps (megacore on v7x)
    with at most MAX_TILE_B rows per step."""
    b_aligned = _round_up(batch, ALIGN_B)
    if b_aligned <= 128:
        return b_aligned
    n_steps = max(2, -(-b_aligned // MAX_TILE_B))
    return _round_up(-(-b_aligned // n_steps), ALIGN_B)


def dn_kernel(x_ref, w1_ref, b1_ref, w2_ref, b2_ref, w3_ref, b3_ref, o_ref):
    # x: f32 (TILE_B, S_pad) -> cast to bf16 MXU operand in-kernel.
    # weights: bf16 [in, out] (VMEM-resident); biases: f32 (1, out).
    # Accumulate in f32; bias + ReLU in f32 (v5e has no bf16 VPU).
    x = x_ref[...].astype(jnp.bfloat16)

    h1 = jnp.dot(x, w1_ref[...], preferred_element_type=jnp.float32)
    h1 = jnp.maximum(h1 + b1_ref[...], 0.0).astype(jnp.bfloat16)

    h2 = jnp.dot(h1, w2_ref[...], preferred_element_type=jnp.float32)
    h2 = jnp.maximum(h2 + b2_ref[...], 0.0).astype(jnp.bfloat16)

    q = jnp.dot(h2, w3_ref[...], preferred_element_type=jnp.float32) + b3_ref[...]
    o_ref[...] = q.astype(o_ref.dtype)   # lane-dense (TILE_B, A_pad) bf16 store


def prepare_dn_params(params):
    """Pad + cast weights/biases ONCE (call at init / target-net sync).

    Returns (padded_params, state_len, num_actions). Zero padding is exact:
    padded x cols hit zero weight rows -> 0; padded hidden lanes are
    ReLU(0 + 0) = 0 and hit zero rows of the next weight.
    """
    w1, b1, w2, b2, w3, b3 = params
    state_len, h1 = w1.shape
    h2 = w2.shape[1]
    num_actions = w3.shape[1]

    s_pad = _round_up(state_len, ALIGN_S)
    h1_pad = _round_up(h1, LANE)
    h2_pad = _round_up(h2, LANE)
    a_pad = _round_up(num_actions, LANE)

    padded = (
        _pad2d(w1, s_pad, h1_pad).astype(jnp.bfloat16),
        _pad2d(b1.reshape(1, -1), 1, h1_pad).astype(jnp.float32),
        _pad2d(w2, h1_pad, h2_pad).astype(jnp.bfloat16),
        _pad2d(b2.reshape(1, -1), 1, h2_pad).astype(jnp.float32),
        _pad2d(w3, h2_pad, a_pad).astype(jnp.bfloat16),
        _pad2d(b3.reshape(1, -1), 1, a_pad).astype(jnp.float32),
    )
    return padded, state_len, num_actions


@functools.partial(jax.jit, static_argnames=("state_len", "num_actions"))
def dn_forward(t, padded_params, *, state_len, num_actions):
    """t.reshape(-1, state_len) -> fused 3-layer MLP Pallas kernel -> (batch, A) f32."""
    w1p, b1p, w2p, b2p, w3p, b3p = padded_params
    s_pad = w1p.shape[0]
    h1_pad, h2_pad, a_pad = w1p.shape[1], w2p.shape[1], w3p.shape[1]

    x = t.reshape(-1, state_len).astype(jnp.float32)
    batch = x.shape[0]

    tile_b = _choose_tile_b(batch)
    b_pad = _round_up(batch, tile_b)
    grid = (b_pad // tile_b,)

    # Only the batch dim (and state dim to a multiple of 8) is padded; x stays f32.
    xp = _pad2d(x, b_pad, s_pad)

    # Weights/biases: full blocks + constant index_map -> resident in VMEM.
    resident = lambda arr: pl.BlockSpec(arr.shape, lambda i: (0,) * arr.ndim)

    flops = 2 * b_pad * (s_pad * h1_pad + h1_pad * h2_pad + h2_pad * a_pad)
    bytes_accessed = (
        xp.size * 4
        + (w1p.size + w2p.size + w3p.size) * 2
        + (b1p.size + b2p.size + b3p.size) * 4
        + b_pad * a_pad * 2
    )

    out = pl.pallas_call(
        dn_kernel,
        out_shape=jax.ShapeDtypeStruct((b_pad, a_pad), jnp.bfloat16),
        grid=grid,
        in_specs=[
            pl.BlockSpec((tile_b, s_pad), lambda i: (i, 0)),   # x pipelined over batch
            resident(w1p), resident(b1p),
            resident(w2p), resident(b2p),
            resident(w3p), resident(b3p),
        ],
        out_specs=pl.BlockSpec((tile_b, a_pad), lambda i: (i, 0)),
        compiler_params=pltpu.CompilerParams(
            dimension_semantics=("parallel",),      # batch steps shard across TCs on v7x
            vmem_limit_bytes=32 * 1024 * 1024,      # safe on v7x's 64 MiB VMEM
        ),
        cost_estimate=pl.CostEstimate(
            flops=flops, transcendentals=0, bytes_accessed=bytes_accessed
        ),
    )(xp, w1p, b1p, w2p, b2p, w3p, b3p)

    return out[:batch, :num_actions].astype(jnp.float32)


def init_dn_params(key, state_len, numb_actions):
    """PyTorch nn.Linear default init (U[-1/sqrt(fan_in), 1/sqrt(fan_in)]).
    Weights stored as [in_features, out_features] (transposed vs. PyTorch)."""
    h1, h2 = state_len * 10, state_len * 5
    ks = jax.random.split(key, 6)

    def lin(kw, kb, fan_in, fan_out):
        bound = 1.0 / jnp.sqrt(jnp.float32(fan_in))
        w = jax.random.uniform(kw, (fan_in, fan_out), jnp.float32, -bound, bound)
        b = jax.random.uniform(kb, (1, fan_out), jnp.float32, -bound, bound)
        return w, b

    w1, b1 = lin(ks[0], ks[1], state_len, h1)
    w2, b2 = lin(ks[2], ks[3], h1, h2)
    w3, b3 = lin(ks[4], ks[5], h2, numb_actions)
    return (w1, b1, w2, b2, w3, b3)


def _ref_forward(t, params, state_len):
    w1, b1, w2, b2, w3, b3 = params
    x = t.reshape(-1, state_len).astype(jnp.float32)
    h = jnp.maximum(x @ w1 + b1, 0.0)
    h = jnp.maximum(h @ w2 + b2, 0.0)
    return h @ w3 + b3


if __name__ == "__main__":
    state_len = 32
    numb_actions = 4

    key = jax.random.PRNGKey(0)
    k_params, k_x1, k_x2 = jax.random.split(key, 3)

    params = init_dn_params(k_params, state_len, numb_actions)
    padded, s_len, n_act = prepare_dn_params(params)   # hoisted pad/cast (done once)

    # Case 1: small inference-style batch (single-tile fast path, no 128-lane x pad).
    x_small = jax.random.normal(k_x1, (8, state_len), jnp.float32)
    q_small = dn_forward(x_small, padded, state_len=s_len, num_actions=n_act)
    jax.block_until_ready(q_small)

    # Case 2: 3-D training-style batch; exercises reshape(-1, S), batch padding/slice,
    # and the multi-step "parallel" grid (2 tiles of 192 rows).
    x_large = jax.random.normal(k_x2, (6, 64, state_len), jnp.float32)
    q_large = dn_forward(x_large, padded, state_len=s_len, num_actions=n_act)
    jax.block_until_ready(q_large)

    # Reference check in plain JAX (f32). bf16 MXU operands + bf16 output store
    # -> loose tolerance.
    for q, x in ((q_small, x_small), (q_large, x_large)):
        ref = _ref_forward(x, params, state_len)
        assert q.shape == ref.shape, (q.shape, ref.shape)
        max_err = float(jnp.max(jnp.abs(q - ref)))
        assert jnp.allclose(q, ref, atol=5e-2, rtol=5e-2), max_err

    print("KERNEL_OK")
</pallas_src>

<mosaic_0001>
module attributes {stable_mosaic.version = 11 : i64} {
  func.func @dn_kernel(%arg0: i32, %arg1: memref<16x32xf32, #tpu.memory_space<vmem>>, %arg2: memref<32x384xbf16, #tpu.memory_space<vmem>>, %arg3: memref<1x384xf32, #tpu.memory_space<vmem>>, %arg4: memref<384x256xbf16, #tpu.memory_space<vmem>>, %arg5: memref<1x256xf32, #tpu.memory_space<vmem>>, %arg6: memref<256x128xbf16, #tpu.memory_space<vmem>>, %arg7: memref<1x128xf32, #tpu.memory_space<vmem>>, %arg8: memref<16x128xbf16, #tpu.memory_space<vmem>>) attributes {dimension_semantics = [#tpu.dimension_semantics<parallel>], iteration_bounds = array<i64: 1>, scalar_prefetch = 0 : i64, scratch_operands = 0 : i64, tpu.core_type = #tpu.core_type<tc>, window_params = [{transform_indices = @transform_0, window_bounds = array<i64: 16, 32>}, {pipeline_mode = #tpu.pipeline_mode<synchronous>, transform_indices = @transform_1, window_bounds = array<i64: 32, 384>}, {pipeline_mode = #tpu.pipeline_mode<synchronous>, transform_indices = @transform_2, window_bounds = array<i64: 1, 384>}, {pipeline_mode = #tpu.pipeline_mode<synchronous>, transform_indices = @transform_3, window_bounds = array<i64: 384, 256>}, {pipeline_mode = #tpu.pipeline_mode<synchronous>, transform_indices = @transform_4, window_bounds = array<i64: 1, 256>}, {pipeline_mode = #tpu.pipeline_mode<synchronous>, transform_indices = @transform_5, window_bounds = array<i64: 256, 128>}, {pipeline_mode = #tpu.pipeline_mode<synchronous>, transform_indices = @transform_6, window_bounds = array<i64: 1, 128>}, {transform_indices = @transform_7, window_bounds = array<i64: 16, 128>}]} {
    %c0 = arith.constant 0 : index
    %c0_0 = arith.constant 0 : index
    %0 = vector.load %arg1[%c0, %c0_0] : memref<16x32xf32, #tpu.memory_space<vmem>>, vector<16x32xf32>
    %1 = arith.truncf %0 : vector<16x32xf32> to vector<16x32xbf16>
    %c0_1 = arith.constant 0 : index
    %c0_2 = arith.constant 0 : index
    %2 = vector.load %arg2[%c0_1, %c0_2] : memref<32x384xbf16, #tpu.memory_space<vmem>>, vector<32x384xbf16>
    %cst = arith.constant dense<0.000000e+00> : vector<16x384xf32>
    %3 = tpu.matmul %1, %2, %cst {dimension_numbers = #tpu.dot_dimension_numbers<[1], [0], [0], [1], [0, 0, 1, 1], [], []>} : vector<16x32xbf16>, vector<32x384xbf16>, vector<16x384xf32> -> vector<16x384xf32>
    %c0_3 = arith.constant 0 : index
    %c0_4 = arith.constant 0 : index
    %4 = vector.load %arg3[%c0_3, %c0_4] : memref<1x384xf32, #tpu.memory_space<vmem>>, vector<1x384xf32>
    %5 = vector.broadcast %4 : vector<1x384xf32> to vector<16x384xf32>
    %6 = arith.addf %3, %5 : vector<16x384xf32>
    %cst_5 = arith.constant 0.000000e+00 : f32
    %7 = vector.broadcast %cst_5 : f32 to vector<16x384xf32>
    %8 = arith.maximumf %6, %7 : vector<16x384xf32>
    %9 = arith.truncf %8 : vector<16x384xf32> to vector<16x384xbf16>
    %c0_6 = arith.constant 0 : index
    %c0_7 = arith.constant 0 : index
    %10 = vector.load %arg4[%c0_6, %c0_7] : memref<384x256xbf16, #tpu.memory_space<vmem>>, vector<384x256xbf16>
    %cst_8 = arith.constant dense<0.000000e+00> : vector<16x256xf32>
    %11 = tpu.matmul %9, %10, %cst_8 {dimension_numbers = #tpu.dot_dimension_numbers<[1], [0], [0], [1], [0, 0, 1, 1], [], []>} : vector<16x384xbf16>, vector<384x256xbf16>, vector<16x256xf32> -> vector<16x256xf32>
    %c0_9 = arith.constant 0 : index
    %c0_10 = arith.constant 0 : index
    %12 = vector.load %arg5[%c0_9, %c0_10] : memref<1x256xf32, #tpu.memory_space<vmem>>, vector<1x256xf32>
    %13 = vector.broadcast %12 : vector<1x256xf32> to vector<16x256xf32>
    %14 = arith.addf %11, %13 : vector<16x256xf32>
    %cst_11 = arith.constant 0.000000e+00 : f32
    %15 = vector.broadcast %cst_11 : f32 to vector<16x256xf32>
    %16 = arith.maximumf %14, %15 : vector<16x256xf32>
    %17 = arith.truncf %16 : vector<16x256xf32> to vector<16x256xbf16>
    %c0_12 = arith.constant 0 : index
    %c0_13 = arith.constant 0 : index
    %18 = vector.load %arg6[%c0_12, %c0_13] : memref<256x128xbf16, #tpu.memory_space<vmem>>, vector<256x128xbf16>
    %cst_14 = arith.constant dense<0.000000e+00> : vector<16x128xf32>
    %19 = tpu.matmul %17, %18, %cst_14 {dimension_numbers = #tpu.dot_dimension_numbers<[1], [0], [0], [1], [0, 0, 1, 1], [], []>} : vector<16x256xbf16>, vector<256x128xbf16>, vector<16x128xf32> -> vector<16x128xf32>
    %c0_15 = arith.constant 0 : index
    %c0_16 = arith.constant 0 : index
    %20 = vector.load %arg7[%c0_15, %c0_16] : memref<1x128xf32, #tpu.memory_space<vmem>>, vector<1x128xf32>
    %21 = vector.broadcast %20 : vector<1x128xf32> to vector<16x128xf32>
    %22 = arith.addf %19, %21 : vector<16x128xf32>
    %23 = arith.truncf %22 : vector<16x128xf32> to vector<16x128xbf16>
    %c0_17 = arith.constant 0 : index
    %c0_18 = arith.constant 0 : index
    %24 = vector.load %arg8[%c0_17, %c0_18] : memref<16x128xbf16, #tpu.memory_space<vmem>>, vector<16x128xbf16>
    tpu.vector_store %arg8[%c0_17, %c0_18], %23 {strides = array<i32>} : memref<16x128xbf16, #tpu.memory_space<vmem>>, vector<16x128xbf16>,
    return
  }
  func.func @transform_0(%arg0: i32) -> (i32, i32) {
    %c0_i32 = arith.constant 0 : i32
    %c0_i32_0 = arith.constant 0 : i32
    return %arg0, %c0_i32 : i32, i32
  }
  func.func @transform_1(%arg0: i32) -> (i32, i32) {
    %c0_i32 = arith.constant 0 : i32
    %c0_i32_0 = arith.constant 0 : i32
    %c0_i32_1 = arith.constant 0 : i32
    return %c0_i32, %c0_i32_0 : i32, i32
  }
  func.func @transform_2(%arg0: i32) -> (i32, i32) {
    %c0_i32 = arith.constant 0 : i32
    %c0_i32_0 = arith.constant 0 : i32
    %c0_i32_1 = arith.constant 0 : i32
    return %c0_i32, %c0_i32_0 : i32, i32
  }
  func.func @transform_3(%arg0: i32) -> (i32, i32) {
    %c0_i32 = arith.constant 0 : i32
    %c0_i32_0 = arith.constant 0 : i32
    %c0_i32_1 = arith.constant 0 : i32
    return %c0_i32, %c0_i32_0 : i32, i32
  }
  func.func @transform_4(%arg0: i32) -> (i32, i32) {
    %c0_i32 = arith.constant 0 : i32
    %c0_i32_0 = arith.constant 0 : i32
    %c0_i32_1 = arith.constant 0 : i32
    return %c0_i32, %c0_i32_0 : i32, i32
  }
  func.func @transform_5(%arg0: i32) -> (i32, i32) {
    %c0_i32 = arith.constant 0 : i32
    %c0_i32_0 = arith.constant 0 : i32
    %c0_i32_1 = arith.constant 0 : i32
    return %c0_i32, %c0_i32_0 : i32, i32
  }
  func.func @transform_6(%arg0: i32) -> (i32, i32) {
    %c0_i32 = arith.constant 0 : i32
    %c0_i32_0 = arith.constant 0 : i32
    %c0_i32_1 = arith.constant 0 : i32
    return %c0_i32, %c0_i32_0 : i32, i32
  }
  func.func @transform_7(%arg0: i32) -> (i32, i32) {
    %c0_i32 = arith.constant 0 : i32
    %c0_i32_0 = arith.constant 0 : i32
    return %arg0, %c0_i32 : i32, i32
  }
}

</mosaic_0001>

<llo_original>
// kernel: dn_forward.1
$region0: #{dn_forward.1}
  #allocation0 [shape = 'u32[]', space=smem, size = 0x4, offset = 0x4, fixed_abs, tag = 'smem constant byte address 0x4 - core index']
  #allocation1 [shape = 'u32[144,128]{1,0:T(1,128)}', space=vmem, size = 0x12000, scoped, tag = 'internal scratch']
  %s0 = inlined_call_operand.vmem [shape: f32[16,32], index: 0, kind: input, shape index: {}]
  %s1 = inlined_call_operand.hbm [shape: bf16[32,384], index: 1, kind: input, shape index: {}]
  %s2 = inlined_call_operand.vmem [shape: f32[1,384], index: 2, kind: input, shape index: {}]
  %s3 = inlined_call_operand.hbm [shape: bf16[384,256], index: 3, kind: input, shape index: {}]
  %s4 = inlined_call_operand.vmem [shape: f32[1,256], index: 4, kind: input, shape index: {}]
  %s5 = inlined_call_operand.hbm [shape: bf16[256,128], index: 5, kind: input, shape index: {}]
  %s6 = inlined_call_operand.vmem [shape: f32[1,128], index: 6, kind: input, shape index: {}]
  %s7 = inlined_call_operand.vmem [shape: bf16[16,128], index: 7, kind: output, shape index: {}]
  %s8 = sld [smem:[#allocation0]]
  $region50: #{dn_forward.1} parent=0
    _
  %s10 = ssub.s32 1, %s8
  %s11 = scalar_select 0, %s10, %s8
  $region1: #{dn_forward.1} parent=0
    #allocation2 [shape = 'u8[24576]{0}', space=vmem, size = 0x6000, scoped, tag = 'input window, operand 1, single buffered']
    #allocation3 [shape = 's32[1]{0}', space=sflag, size = 0x4, scoped, tag = 'scoped memory for dn_forward.1']
    #allocation4 [shape = 'u8[196608]{0}', space=vmem, size = 0x30000, scoped, tag = 'input window, operand 3, single buffered']
    #allocation5 [shape = 's32[1]{0}', space=sflag, size = 0x4, scoped, tag = 'scoped memory for dn_forward.1']
    #allocation6 [shape = 'u8[65536]{0}', space=vmem, size = 0x10000, scoped, tag = 'input window, operand 5, single buffered']
    %12 = vsyncpa [#allocation3], 0
    %13 = vsyncpa [#allocation5], 0
    // Predicated region
    $region2: #{dn_forward.1} parent=1 // pred_check
      _
    $region3: #{dn_forward.1} parent=1 // pred_check_branch
      %15 = sbr.rel (0) target = $region5
    $region4: #{dn_forward.1} parent=1 // pred_region
      _
    $region5: #{dn_forward.1} parent=1 // pred_fallthru
      _
    // Predicated region
    $region6: #{dn_forward.1} parent=1 // pred_check
      _
    $region7: #{dn_forward.1} parent=1 // pred_check_branch
      %17 = sbr.rel (0) target = $region9
    $region8: #{dn_forward.1} parent=1 // pred_region
      %s19 = ssub.s32 768, 768
      %20 = vsyncadd [#allocation3], %s19
      %s21 = sshll.u32 [#allocation2], 4
      %s22 = int_to_ptr.vmem [resolvable:$true] %s21
      %27 = dma.hbm_to_vmem [thread:$0]  %s1, 768, %s22, [#allocation3], 192, 192, 12
    $region9: #{dn_forward.1} parent=1 // pred_fallthru
      _
    // Predicated region
    $region10: #{dn_forward.1} parent=1 // pred_check
      _
    $region11: #{dn_forward.1} parent=1 // pred_check_branch
      %29 = sbr.rel (0) target = $region13
    $region12: #{dn_forward.1} parent=1 // pred_region
      _
    $region13: #{dn_forward.1} parent=1 // pred_fallthru
      _
    // Predicated region
    $region14: #{dn_forward.1} parent=1 // pred_check
      _
    $region15: #{dn_forward.1} parent=1 // pred_check_branch
      %31 = sbr.rel (0) target = $region17
    $region16: #{dn_forward.1} parent=1 // pred_region
      %s33 = ssub.s32 6144, 6144
      %34 = vsyncadd [#allocation5], %s33
      %s35 = sshll.u32 [#allocation4], 4
      %s36 = int_to_ptr.vmem [resolvable:$true] %s35
      %41 = dma.hbm_to_vmem [thread:$0]  %s3, 6144, %s36, [#allocation5], 128, 128, 8
    $region17: #{dn_forward.1} parent=1 // pred_fallthru
      _
    // Predicated region
    $region18: #{dn_forward.1} parent=1 // pred_check
      _
    $region19: #{dn_forward.1} parent=1 // pred_check_branch
      %43 = sbr.rel (0) target = $region21
    $region20: #{dn_forward.1} parent=1 // pred_region
      _
    $region21: #{dn_forward.1} parent=1 // pred_fallthru
      _
    // Predicated region
    $region22: #{dn_forward.1} parent=1 // pred_check
      _
    $region23: #{dn_forward.1} parent=1 // pred_check_branch
      %45 = sbr.rel (0) target = $region25
    $region24: #{dn_forward.1} parent=1 // pred_region
      %s47 = ssub.s32 2048, 2048
      %48 = vsyncadd [#allocation5], %s47
      %s49 = sshll.u32 [#allocation6], 4
      %s50 = int_to_ptr.vmem [resolvable:$true] %s49
      %55 = dma.hbm_to_vmem [thread:$0]  %s5, 2048, %s50, [#allocation5], 64, 64, 4
    $region25: #{dn_forward.1} parent=1 // pred_fallthru
      _
    // Predicated region
    $region26: #{dn_forward.1} parent=1 // pred_check
      _
    $region27: #{dn_forward.1} parent=1 // pred_check_branch
      %57 = sbr.rel (0) target = $region29
    $region28: #{dn_forward.1} parent=1 // pred_region
      _
    $region29: #{dn_forward.1} parent=1 // pred_fallthru
      _
    // Predicated region
    $region30: #{dn_forward.1} parent=1 // pred_check
      _
    $region31: #{dn_forward.1} parent=1 // pred_check_branch
      %59 = sbr.rel (0) target = $region33
    $region32: #{dn_forward.1} parent=1 // pred_region
      %60 = dma.done [#allocation3], 768
    $region33: #{dn_forward.1} parent=1 // pred_fallthru
      _
    // Predicated region
    $region34: #{dn_forward.1} parent=1 // pred_check
      _
    $region35: #{dn_forward.1} parent=1 // pred_check_branch
      %62 = sbr.rel (0) target = $region37
    $region36: #{dn_forward.1} parent=1 // pred_region
      %63 = dma.done [#allocation5], 6144
    $region37: #{dn_forward.1} parent=1 // pred_fallthru
      _
    // Predicated region
    $region38: #{dn_forward.1} parent=1 // pred_check
      _
    $region39: #{dn_forward.1} parent=1 // pred_check_branch
      %65 = sbr.rel (0) target = $region41
    $region40: #{dn_forward.1} parent=1 // pred_region
      %66 = dma.done [#allocation5], 2048
    $region41: #{dn_forward.1} parent=1 // pred_fallthru
      _
    %v68 = vld [vmem:[%s0] sm:$0xff]
    %v69 = vld [vmem:[%s0 + $0x8] sm:$0xff]
    %v70 = vpack.c.bf16 %v69, %v68
    %v71 = vld [vmem:[#allocation2] sm:$0xff]
    %v72 = vld [vmem:[#allocation2 + $0x8] sm:$0xf]
    %v73 = vld [vmem:[#allocation2 + $0xc] sm:$0xff]
    %v74 = vld [vmem:[#allocation2 + $0x14] sm:$0xf]
    %v75 = vld [vmem:[#allocation2 + $0x18] sm:$0xff]
    %v76 = vld [vmem:[#allocation2 + $0x20] sm:$0xf]
    %v77 = vld [vmem:[#allocation2 + $0x24] sm:$0xff]
    %v78 = vld [vmem:[#allocation2 + $0x2c] sm:$0xf]
    %v79 = vld [vmem:[%s2] sm:$0x7]
    %v81 = vlaneseq
    %v82 = vshrl.u32 %v81, 7
    %v83 = vsub.s32 0, %v82
    %v84 = vrot.slane %v79, %v83
    %v85 = vlaneseq
    %v86 = vshrl.u32 %v85, 7
    %v87 = vsub.s32 1, %v86
    %v88 = vrot.slane %v79, %v87
    %v89 = vlaneseq
    %v90 = vshrl.u32 %v89, 7
    %v91 = vsub.s32 2, %v90
    %v92 = vrot.slane %v79, %v91
    %v104 = vunpack.c.l.b16 %v71
    %v105 = vunpack.c.h.b16 %v71
    %v106 = vunpack.c.l.b16 %v72
    %v107 = vunpack.c.l.b16 %v73
    %v108 = vunpack.c.h.b16 %v73
    %v109 = vunpack.c.l.b16 %v74
    %v110 = vunpack.c.l.b16 %v75
    %v111 = vunpack.c.h.b16 %v75
    %v112 = vunpack.c.l.b16 %v76
    %v113 = vunpack.c.l.b16 %v77
    %v114 = vunpack.c.h.b16 %v77
    %v115 = vunpack.c.l.b16 %v78
    %v116 = vpack.c.b16 %v107, %v104
    %v117 = vpack.c.b16 %v108, %v105
    %v118 = vpack.c.b16 %v109, %v106
    %v119 = vpack.c.b16 %v113, %v110
    %v120 = vpack.c.b16 %v114, %v111
    %v121 = vpack.c.b16 %v115, %v112
    %vm128 = vcmask 261120
    %v130 = vsel %vm128, %v70, 0
    %132 = vmatprep.subr.bf16.mxu0 %v117
    %133 = vmatpush1.bf16.msra.mxu0 %v116
    %134 = vmatprep.subr.bf16.mxu0 %v120
    %135 = vmatpush1.bf16.msra.mxu0 %v119
    %136 = vmatprep.subr.bf16.mxu0 0
    %137 = vmatpush1.bf16.msra.mxu0 0
    %138 = vmatprep.subr.bf16.mxu0 0
    %139 = vmatpush1.bf16.msra.mxu0 0
    %140 = vmatprep.subr.bf16.mxu0 0
    %141 = vmatpush1.bf16.msra.mxu0 0
    %142 = vmatprep.subr.bf16.mxu0 0
    %143 = vmatpush1.bf16.msra.mxu0 0
    %144 = vmatprep.subr.bf16.mxu0 0
    %145 = vmatpush1.bf16.msra.mxu0 0
    %146 = vmatprep.subr.bf16.mxu0 0
    %147 = vmatpush1.bf16.msra.mxu0 0
    %148 = vmatprep.subr.bf16.mxu0 0
    %149 = vmatpush1.bf16.msra.mxu0 0
    %150 = vmatprep.subr.bf16.mxu0 0
    %151 = vmatpush1.bf16.msra.mxu0 0
    %152 = vmatprep.subr.bf16.mxu0 0
    %153 = vmatpush1.bf16.msra.mxu0 0
    %154 = vmatprep.subr.bf16.mxu0 0
    %155 = vmatpush1.bf16.msra.mxu0 0
    %156 = vmatprep.subr.bf16.mxu0 0
    %157 = vmatpush1.bf16.msra.mxu0 0
    %158 = vmatprep.subr.bf16.mxu0 0
    %159 = vmatpush1.bf16.msra.mxu0 0
    %160 = vmatprep.subr.bf16.mxu0 0
    %161 = vmatpush1.bf16.msra.mxu0 0
    %162 = vmatprep.subr.bf16.mxu0 0
    %163 = vmatpush1.bf16.msra.mxu0 0
    %164 = vmatprep.mubr.bf16.mxu0 0
    %165 = vmatmul.mubr.bf16.gmra.mrb[0].mxu0 %v130
    %v166 = vpop.f32.mrb[0].mxu0
    %v167 = vadd.f32 %v84, %v166
    %v168 = vpop.f32.mrb[0].mxu0
    %v169 = vadd.f32 %v88, %v168
    %v170 = vpop.f32.mrb[0].mxu0
    %v171 = vadd.f32 %v84, %v170
    %v172 = vpop.f32.mrb[0].mxu0
    %v173 = vadd.f32 %v88, %v172
    %174 = vdwg.mxu0
    %175 = vmatprep.subr.bf16.mxu0 0
    %176 = vmatpush1.bf16.msra.mxu0 %v118
    %177 = vmatprep.subr.bf16.mxu0 0
    %178 = vmatpush1.bf16.msra.mxu0 %v121
    %179 = vmatprep.subr.bf16.mxu0 0
    %180 = vmatpush1.bf16.msra.mxu0 0
    %181 = vmatprep.subr.bf16.mxu0 0
    %182 = vmatpush1.bf16.msra.mxu0 0
    %183 = vmatprep.subr.bf16.mxu0 0
    %184 = vmatpush1.bf16.msra.mxu0 0
    %185 = vmatprep.subr.bf16.mxu0 0
    %186 = vmatpush1.bf16.msra.mxu0 0
    %187 = vmatprep.subr.bf16.mxu0 0
    %188 = vmatpush1.bf16.msra.mxu0 0
    %189 = vmatprep.subr.bf16.mxu0 0
    %190 = vmatpush1.bf16.msra.mxu0 0
    %191 = vmatprep.subr.bf16.mxu0 0
    %192 = vmatpush1.bf16.msra.mxu0 0
    %193 = vmatprep.subr.bf16.mxu0 0
    %194 = vmatpush1.bf16.msra.mxu0 0
    %195 = vmatprep.subr.bf16.mxu0 0
    %196 = vmatpush1.bf16.msra.mxu0 0
    %197 = vmatprep.subr.bf16.mxu0 0
    %198 = vmatpush1.bf16.msra.mxu0 0
    %199 = vmatprep.subr.bf16.mxu0 0
    %200 = vmatpush1.bf16.msra.mxu0 0
    %201 = vmatprep.subr.bf16.mxu0 0
    %202 = vmatpush1.bf16.msra.mxu0 0
    %203 = vmatprep.subr.bf16.mxu0 0
    %204 = vmatpush1.bf16.msra.mxu0 0
    %205 = vmatprep.subr.bf16.mxu0 0
    %206 = vmatpush1.bf16.msra.mxu0 0
    %207 = vmatprep.mubr.bf16.mxu0 0
    %208 = vmatmul.mubr.bf16.gmra.mrb[0].mxu0 %v130
    %v209 = vpop.f32.mrb[0].mxu0
    %v210 = vadd.f32 %v92, %v209
    %v211 = vpop.f32.mrb[0].mxu0
    %v212 = vpop.f32.mrb[0].mxu0
    %v213 = vadd.f32 %v92, %v212
    %v214 = vpop.f32.mrb[0].mxu0
    %215 = vdwg.mxu0
    %v216 = vmax.f32 %v167, 0.0
    %v217 = vmax.f32 %v169, 0.0
    %v218 = vmax.f32 %v210, 0.0
    %v219 = vmax.f32 %v171, 0.0
    %v220 = vmax.f32 %v173, 0.0
    %v221 = vmax.f32 %v213, 0.0
    %v222 = vpack.c.bf16 %v219, %v216
    %v223 = vpack.c.bf16 %v220, %v217
    %v224 = vpack.c.bf16 %v221, %v218
    %v225 = vld [vmem:[#allocation4] sm:$0xff]
    %v226 = vld [vmem:[#allocation4 + $0x8] sm:$0xff]
    %v227 = vld [vmem:[#allocation4 + $0x10] sm:$0xff]
    %v228 = vld [vmem:[#allocation4 + $0x18] sm:$0xff]
    %v229 = vld [vmem:[#allocation4 + $0x20] sm:$0xff]
    %v230 = vld [vmem:[#allocation4 + $0x28] sm:$0xff]
    %v231 = vld [vmem:[#allocation4 + $0x30] sm:$0xff]
    %v232 = vld [vmem:[#allocation4 + $0x38] sm:$0xff]
    %v233 = vld [vmem:[#allocation4 + $0x40] sm:$0xff]
    %v234 = vld [vmem:[#allocation4 + $0x48] sm:$0xff]
    %v235 = vld [vmem:[#allocation4 + $0x50] sm:$0xff]
    %v236 = vld [vmem:[#allocation4 + $0x58] sm:$0xff]
    %v237 = vld [vmem:[#allocation4 + $0x60] sm:$0xff]
    %v238 = vld [vmem:[#allocation4 + $0x68] sm:$0xff]
    %v239 = vld [vmem:[#allocation4 + $0x70] sm:$0xff]
    %v240 = vld [vmem:[#allocation4 + $0x78] sm:$0xff]
    %v241 = vld [vmem:[#allocation4 + $0x80] sm:$0xff]
    %v242 = vld [vmem:[#allocation4 + $0x88] sm:$0xff]
    %v243 = vld [vmem:[#allocation4 + $0x90] sm:$0xff]
    %v244 = vld [vmem:[#allocation4 + $0x98] sm:$0xff]
    %v245 = vld [vmem:[#allocation4 + $0xa0] sm:$0xff]
    %v246 = vld [vmem:[#allocation4 + $0xa8] sm:$0xff]
    %v247 = vld [vmem:[#allocation4 + $0xb0] sm:$0xff]
    %v248 = vld [vmem:[#allocation4 + $0xb8] sm:$0xff]
    %v249 = vld [vmem:[#allocation4 + $0xc0] sm:$0xff]
    %v250 = vld [vmem:[#allocation4 + $0xc8] sm:$0xff]
    %v251 = vld [vmem:[#allocation4 + $0xd0] sm:$0xff]
    %v252 = vld [vmem:[#allocation4 + $0xd8] sm:$0xff]
    %v253 = vld [vmem:[#allocation4 + $0xe0] sm:$0xff]
    %v254 = vld [vmem:[#allocation4 + $0xe8] sm:$0xff]
    %v255 = vld [vmem:[#allocation4 + $0xf0] sm:$0xff]
    %v256 = vld [vmem:[#allocation4 + $0xf8] sm:$0xff]
    %v257 = vld [vmem:[#allocation4 + $0x100] sm:$0xff]
    %v258 = vld [vmem:[#allocation4 + $0x108] sm:$0xff]
    %v259 = vld [vmem:[#allocation4 + $0x110] sm:$0xff]
    %v260 = vld [vmem:[#allocation4 + $0x118] sm:$0xff]
    %v261 = vld [vmem:[#allocation4 + $0x120] sm:$0xff]
    %v262 = vld [vmem:[#allocation4 + $0x128] sm:$0xff]
    %v263 = vld [vmem:[#allocation4 + $0x130] sm:$0xff]
    %v264 = vld [vmem:[#allocation4 + $0x138] sm:$0xff]
    %v265 = vld [vmem:[#allocation4 + $0x140] sm:$0xff]
    %v266 = vld [vmem:[#allocation4 + $0x148] sm:$0xff]
    %v267 = vld [vmem:[#allocation4 + $0x150] sm:$0xff]
    %v268 = vld [vmem:[#allocation4 + $0x158] sm:$0xff]
    %v269 = vld [vmem:[#allocation4 + $0x160] sm:$0xff]
    %v270 = vld [vmem:[#allocation4 + $0x168] sm:$0xff]
    %v271 = vld [vmem:[#allocation4 + $0x170] sm:$0xff]
    %v272 = vld [vmem:[#allocation4 + $0x178] sm:$0xff]
    %v273 = vld [vmem:[%s4] sm:$0x3]
    %v275 = vlaneseq
    %v276 = vshrl.u32 %v275, 7
    %v277 = vsub.s32 0, %v276
    %v278 = vrot.slane %v273, %v277
    %v279 = vlaneseq
    %v280 = vshrl.u32 %v279, 7
    %v281 = vsub.s32 1, %v280
    %v282 = vrot.slane %v273, %v281
    %v333 = vunpack.c.l.b16 %v225
    %v334 = vunpack.c.h.b16 %v225
    %v335 = vunpack.c.l.b16 %v226
    %v336 = vunpack.c.h.b16 %v226
    %v337 = vunpack.c.l.b16 %v227
    %v338 = vunpack.c.h.b16 %v227
    %v339 = vunpack.c.l.b16 %v228
    %v340 = vunpack.c.h.b16 %v228
    %v341 = vunpack.c.l.b16 %v229
    %v342 = vunpack.c.h.b16 %v229
    %v343 = vunpack.c.l.b16 %v230
    %v344 = vunpack.c.h.b16 %v230
    %v345 = vunpack.c.l.b16 %v231
    %v346 = vunpack.c.h.b16 %v231
    %v347 = vunpack.c.l.b16 %v232
    %v348 = vunpack.c.h.b16 %v232
    %v349 = vunpack.c.l.b16 %v233
    %v350 = vunpack.c.h.b16 %v233
    %v351 = vunpack.c.l.b16 %v234
    %v352 = vunpack.c.h.b16 %v234
    %v353 = vunpack.c.l.b16 %v235
    %v354 = vunpack.c.h.b16 %v235
    %v355 = vunpack.c.l.b16 %v236
    %v356 = vunpack.c.h.b16 %v236
    %v357 = vunpack.c.l.b16 %v237
    %v358 = vunpack.c.h.b16 %v237
    %v359 = vunpack.c.l.b16 %v238
    %v360 = vunpack.c.h.b16 %v238
    %v361 = vunpack.c.l.b16 %v239
    %v362 = vunpack.c.h.b16 %v239
    %v363 = vunpack.c.l.b16 %v240
    %v364 = vunpack.c.h.b16 %v240
    %v365 = vunpack.c.l.b16 %v241
    %v366 = vunpack.c.h.b16 %v241
    %v367 = vunpack.c.l.b16 %v242
    %v368 = vunpack.c.h.b16 %v242
    %v369 = vunpack.c.l.b16 %v243
    %v370 = vunpack.c.h.b16 %v243
    %v371 = vunpack.c.l.b16 %v244
    %v372 = vunpack.c.h.b16 %v244
    %v373 = vunpack.c.l.b16 %v245
    %v374 = vunpack.c.h.b16 %v245
    %v375 = vunpack.c.l.b16 %v246
    %v376 = vunpack.c.h.b16 %v246
    %v377 = vunpack.c.l.b16 %v247
    %v378 = vunpack.c.h.b16 %v247
    %v379 = vunpack.c.l.b16 %v248
    %v380 = vunpack.c.h.b16 %v248
    %v381 = vunpack.c.l.b16 %v249
    %v382 = vunpack.c.h.b16 %v249
    %v383 = vunpack.c.l.b16 %v250
    %v384 = vunpack.c.h.b16 %v250
    %v385 = vunpack.c.l.b16 %v251
    %v386 = vunpack.c.h.b16 %v251
    %v387 = vunpack.c.l.b16 %v252
    %v388 = vunpack.c.h.b16 %v252
    %v389 = vunpack.c.l.b16 %v253
    %v390 = vunpack.c.h.b16 %v253
    %v391 = vunpack.c.l.b16 %v254
    %v392 = vunpack.c.h.b16 %v254
    %v393 = vunpack.c.l.b16 %v255
    %v394 = vunpack.c.h.b16 %v255
    %v395 = vunpack.c.l.b16 %v256
    %v396 = vunpack.c.h.b16 %v256
    %v397 = vunpack.c.l.b16 %v257
    %v398 = vunpack.c.h.b16 %v257
    %v399 = vunpack.c.l.b16 %v258
    %v400 = vunpack.c.h.b16 %v258
    %v401 = vunpack.c.l.b16 %v259
    %v402 = vunpack.c.h.b16 %v259
    %v403 = vunpack.c.l.b16 %v260
    %v404 = vunpack.c.h.b16 %v260
    %v405 = vunpack.c.l.b16 %v261
    %v406 = vunpack.c.h.b16 %v261
    %v407 = vunpack.c.l.b16 %v262
    %v408 = vunpack.c.h.b16 %v262
    %v409 = vunpack.c.l.b16 %v263
    %v410 = vunpack.c.h.b16 %v263
    %v411 = vunpack.c.l.b16 %v264
    %v412 = vunpack.c.h.b16 %v264
    %v413 = vunpack.c.l.b16 %v265
    %v414 = vunpack.c.h.b16 %v265
    %v415 = vunpack.c.l.b16 %v266
    %v416 = vunpack.c.h.b16 %v266
    %v417 = vunpack.c.l.b16 %v267
    %v418 = vunpack.c.h.b16 %v267
    %v419 = vunpack.c.l.b16 %v268
    %v420 = vunpack.c.h.b16 %v268
    %v421 = vunpack.c.l.b16 %v269
    %v422 = vunpack.c.h.b16 %v269
    %v423 = vunpack.c.l.b16 %v270
    %v424 = vunpack.c.h.b16 %v270
    %v425 = vunpack.c.l.b16 %v271
    %v426 = vunpack.c.h.b16 %v271
    %v427 = vunpack.c.l.b16 %v272
    %v428 = vunpack.c.h.b16 %v272
    %v429 = vpack.c.b16 %v335, %v333
    %v430 = vpack.c.b16 %v336, %v334
    %v431 = vpack.c.b16 %v339, %v337
    %v432 = vpack.c.b16 %v340, %v338
    %v433 = vpack.c.b16 %v343, %v341
    %v434 = vpack.c.b16 %v344, %v342
    %v435 = vpack.c.b16 %v347, %v345
    %v436 = vpack.c.b16 %v348, %v346
    %v437 = vpack.c.b16 %v351, %v349
    %v438 = vpack.c.b16 %v352, %v350
    %v439 = vpack.c.b16 %v355, %v353
    %v440 = vpack.c.b16 %v356, %v354
    %v441 = vpack.c.b16 %v359, %v357
    %v442 = vpack.c.b16 %v360, %v358
    %v443 = vpack.c.b16 %v363, %v361
    %v444 = vpack.c.b16 %v364, %v362
    %v445 = vpack.c.b16 %v367, %v365
    %v446 = vpack.c.b16 %v368, %v366
    %v447 = vpack.c.b16 %v371, %v369
    %v448 = vpack.c.b16 %v372, %v370
    %v449 = vpack.c.b16 %v375, %v373
    %v450 = vpack.c.b16 %v376, %v374
    %v451 = vpack.c.b16 %v379, %v377
    %v452 = vpack.c.b16 %v380, %v378
    %v453 = vpack.c.b16 %v383, %v381
    %v454 = vpack.c.b16 %v384, %v382
    %v455 = vpack.c.b16 %v387, %v385
    %v456 = vpack.c.b16 %v388, %v386
    %v457 = vpack.c.b16 %v391, %v389
    %v458 = vpack.c.b16 %v392, %v390
    %v459 = vpack.c.b16 %v395, %v393
    %v460 = vpack.c.b16 %v396, %v394
    %v461 = vpack.c.b16 %v399, %v397
    %v462 = vpack.c.b16 %v400, %v398
    %v463 = vpack.c.b16 %v403, %v401
    %v464 = vpack.c.b16 %v404, %v402
    %v465 = vpack.c.b16 %v407, %v405
    %v466 = vpack.c.b16 %v408, %v406
    %v467 = vpack.c.b16 %v411, %v409
    %v468 = vpack.c.b16 %v412, %v410
    %v469 = vpack.c.b16 %v415, %v413
    %v470 = vpack.c.b16 %v416, %v414
    %v471 = vpack.c.b16 %v419, %v417
    %v472 = vpack.c.b16 %v420, %v418
    %v473 = vpack.c.b16 %v423, %v421
    %v474 = vpack.c.b16 %v424, %v422
    %v475 = vpack.c.b16 %v427, %v425
    %v476 = vpack.c.b16 %v428, %v426
    %525 = vmatprep.subr.bf16.mxu0 %v430
    %526 = vmatpush1.bf16.msra.mxu0 %v429
    %527 = vmatprep.subr.bf16.mxu0 %v432
    %528 = vmatpush1.bf16.msra.mxu0 %v431
    %529 = vmatprep.subr.bf16.mxu0 %v434
    %530 = vmatpush1.bf16.msra.mxu0 %v433
    %531 = vmatprep.subr.bf16.mxu0 %v436
    %532 = vmatpush1.bf16.msra.mxu0 %v435
    %533 = vmatprep.subr.bf16.mxu0 %v438
    %534 = vmatpush1.bf16.msra.mxu0 %v437
    %535 = vmatprep.subr.bf16.mxu0 %v440
    %536 = vmatpush1.bf16.msra.mxu0 %v439
    %537 = vmatprep.subr.bf16.mxu0 %v442
    %538 = vmatpush1.bf16.msra.mxu0 %v441
    %539 = vmatprep.subr.bf16.mxu0 %v444
    %540 = vmatpush1.bf16.msra.mxu0 %v443
    %541 = vmatprep.subr.bf16.mxu0 %v446
    %542 = vmatpush1.bf16.msra.mxu0 %v445
    %543 = vmatprep.subr.bf16.mxu0 %v448
    %544 = vmatpush1.bf16.msra.mxu0 %v447
    %545 = vmatprep.subr.bf16.mxu0 %v450
    %546 = vmatpush1.bf16.msra.mxu0 %v449
    %547 = vmatprep.subr.bf16.mxu0 %v452
    %548 = vmatpush1.bf16.msra.mxu0 %v451
    %549 = vmatprep.subr.bf16.mxu0 %v454
    %550 = vmatpush1.bf16.msra.mxu0 %v453
    %551 = vmatprep.subr.bf16.mxu0 %v456
    %552 = vmatpush1.bf16.msra.mxu0 %v455
    %553 = vmatprep.subr.bf16.mxu0 %v458
    %554 = vmatpush1.bf16.msra.mxu0 %v457
    %555 = vmatprep.subr.bf16.mxu0 %v460
    %556 = vmatpush1.bf16.msra.mxu0 %v459
    %557 = vmatprep.mubr.bf16.mxu0 %v223
    %558 = vmatmul.mubr.bf16.gmra.mrb[0].mxu0 %v222
    %v559 = vpop.f32.mrb[0].mxu0
    %v560 = vadd.f32 %v278, %v559
    %v561 = vpop.f32.mrb[0].mxu0
    %v562 = vadd.f32 %v282, %v561
    %v563 = vpop.f32.mrb[0].mxu0
    %v564 = vadd.f32 %v278, %v563
    %v565 = vpop.f32.mrb[0].mxu0
    %v566 = vadd.f32 %v282, %v565
    %567 = vdwg.mxu0
    %568 = vmatprep.subr.bf16.mxu0 %v462
    %569 = vmatpush1.bf16.msra.mxu0 %v461
    %570 = vmatprep.subr.bf16.mxu0 %v464
    %571 = vmatpush1.bf16.msra.mxu0 %v463
    %572 = vmatprep.subr.bf16.mxu0 %v466
    %573 = vmatpush1.bf16.msra.mxu0 %v465
    %574 = vmatprep.subr.bf16.mxu0 %v468
    %575 = vmatpush1.bf16.msra.mxu0 %v467
    %576 = vmatprep.subr.bf16.mxu0 %v470
    %577 = vmatpush1.bf16.msra.mxu0 %v469
    %578 = vmatprep.subr.bf16.mxu0 %v472
    %579 = vmatpush1.bf16.msra.mxu0 %v471
    %580 = vmatprep.subr.bf16.mxu0 %v474
    %581 = vmatpush1.bf16.msra.mxu0 %v473
    %582 = vmatprep.subr.bf16.mxu0 %v476
    %583 = vmatpush1.bf16.msra.mxu0 %v475
    %584 = vmatprep.subr.bf16.mxu0 0
    %585 = vmatpush1.bf16.msra.mxu0 0
    %586 = vmatprep.subr.bf16.mxu0 0
    %587 = vmatpush1.bf16.msra.mxu0 0
    %588 = vmatprep.subr.bf16.mxu0 0
    %589 = vmatpush1.bf16.msra.mxu0 0
    %590 = vmatprep.subr.bf16.mxu0 0
    %591 = vmatpush1.bf16.msra.mxu0 0
    %592 = vmatprep.subr.bf16.mxu0 0
    %593 = vmatpush1.bf16.msra.mxu0 0
    %594 = vmatprep.subr.bf16.mxu0 0
    %595 = vmatpush1.bf16.msra.mxu0 0
    %596 = vmatprep.subr.bf16.mxu0 0
    %597 = vmatpush1.bf16.msra.mxu0 0
    %598 = vmatprep.subr.bf16.mxu0 0
    %599 = vmatpush1.bf16.msra.mxu0 0
    %600 = vmatprep.mubr.bf16.mxu0 0
    %601 = vmatmul.mubr.bf16.gmra.mrb[0].mxu0 %v224
    %v602 = vpop.f32.mrb[0].mxu0
    %v603 = vadd.f32 %v560, %v602
    %v604 = vpop.f32.mrb[0].mxu0
    %v605 = vadd.f32 %v562, %v604
    %v606 = vpop.f32.mrb[0].mxu0
    %v607 = vadd.f32 %v564, %v606
    %v608 = vpop.f32.mrb[0].mxu0
    %v609 = vadd.f32 %v566, %v608
    %610 = vdwg.mxu0
    %v611 = vmax.f32 %v603, 0.0
    %v612 = vmax.f32 %v605, 0.0
    %v613 = vmax.f32 %v607, 0.0
    %v614 = vmax.f32 %v609, 0.0
    %v615 = vpack.c.bf16 %v613, %v611
    %v616 = vpack.c.bf16 %v614, %v612
    %v617 = vld [vmem:[#allocation6] sm:$0xf]
    %v618 = vld [vmem:[#allocation6 + $0x4] sm:$0xf]
    %v619 = vld [vmem:[#allocation6 + $0x8] sm:$0xf]
    %v620 = vld [vmem:[#allocation6 + $0xc] sm:$0xf]
    %v621 = vld [vmem:[#allocation6 + $0x10] sm:$0xf]
    %v622 = vld [vmem:[#allocation6 + $0x14] sm:$0xf]
    %v623 = vld [vmem:[#allocation6 + $0x18] sm:$0xf]
    %v624 = vld [vmem:[#allocation6 + $0x1c] sm:$0xf]
    %v625 = vld [vmem:[#allocation6 + $0x20] sm:$0xf]
    %v626 = vld [vmem:[#allocation6 + $0x24] sm:$0xf]
    %v627 = vld [vmem:[#allocation6 + $0x28] sm:$0xf]
    %v628 = vld [vmem:[#allocation6 + $0x2c] sm:$0xf]
    %v629 = vld [vmem:[#allocation6 + $0x30] sm:$0xf]
    %v630 = vld [vmem:[#allocation6 + $0x34] sm:$0xf]
    %v631 = vld [vmem:[#allocation6 + $0x38] sm:$0xf]
    %v632 = vld [vmem:[#allocation6 + $0x3c] sm:$0xf]
    %v633 = vld [vmem:[#allocation6 + $0x40] sm:$0xf]
    %v634 = vld [vmem:[#allocation6 + $0x44] sm:$0xf]
    %v635 = vld [vmem:[#allocation6 + $0x48] sm:$0xf]
    %v636 = vld [vmem:[#allocation6 + $0x4c] sm:$0xf]
    %v637 = vld [vmem:[#allocation6 + $0x50] sm:$0xf]
    %v638 = vld [vmem:[#allocation6 + $0x54] sm:$0xf]
    %v639 = vld [vmem:[#allocation6 + $0x58] sm:$0xf]
    %v640 = vld [vmem:[#allocation6 + $0x5c] sm:$0xf]
    %v641 = vld [vmem:[#allocation6 + $0x60] sm:$0xf]
    %v642 = vld [vmem:[#allocation6 + $0x64] sm:$0xf]
    %v643 = vld [vmem:[#allocation6 + $0x68] sm:$0xf]
    %v644 = vld [vmem:[#allocation6 + $0x6c] sm:$0xf]
    %v645 = vld [vmem:[#allocation6 + $0x70] sm:$0xf]
    %v646 = vld [vmem:[#allocation6 + $0x74] sm:$0xf]
    %v647 = vld [vmem:[#allocation6 + $0x78] sm:$0xf]
    %v648 = vld [vmem:[#allocation6 + $0x7c] sm:$0xf]
    %v649 = vld [vmem:[%s6] sm:$0x1]
    %v651 = vlaneseq
    %v652 = vshrl.u32 %v651, 7
    %v653 = vsub.s32 0, %v652
    %v654 = vrot.slane %v649, %v653
    %v688 = vunpack.c.l.b16 %v617
    %v689 = vunpack.c.l.b16 %v618
    %v690 = vunpack.c.l.b16 %v619
    %v691 = vunpack.c.l.b16 %v620
    %v692 = vunpack.c.l.b16 %v621
    %v693 = vunpack.c.l.b16 %v622
    %v694 = vunpack.c.l.b16 %v623
    %v695 = vunpack.c.l.b16 %v624
    %v696 = vunpack.c.l.b16 %v625
    %v697 = vunpack.c.l.b16 %v626
    %v698 = vunpack.c.l.b16 %v627
    %v699 = vunpack.c.l.b16 %v628
    %v700 = vunpack.c.l.b16 %v629
    %v701 = vunpack.c.l.b16 %v630
    %v702 = vunpack.c.l.b16 %v631
    %v703 = vunpack.c.l.b16 %v632
    %v704 = vunpack.c.l.b16 %v633
    %v705 = vunpack.c.l.b16 %v634
    %v706 = vunpack.c.l.b16 %v635
    %v707 = vunpack.c.l.b16 %v636
    %v708 = vunpack.c.l.b16 %v637
    %v709 = vunpack.c.l.b16 %v638
    %v710 = vunpack.c.l.b16 %v639
    %v711 = vunpack.c.l.b16 %v640
    %v712 = vunpack.c.l.b16 %v641
    %v713 = vunpack.c.l.b16 %v642
    %v714 = vunpack.c.l.b16 %v643
    %v715 = vunpack.c.l.b16 %v644
    %v716 = vunpack.c.l.b16 %v645
    %v717 = vunpack.c.l.b16 %v646
    %v718 = vunpack.c.l.b16 %v647
    %v719 = vunpack.c.l.b16 %v648
    %v720 = vpack.c.b16 %v689, %v688
    %v721 = vpack.c.b16 %v691, %v690
    %v722 = vpack.c.b16 %v693, %v692
    %v723 = vpack.c.b16 %v695, %v694
    %v724 = vpack.c.b16 %v697, %v696
    %v725 = vpack.c.b16 %v699, %v698
    %v726 = vpack.c.b16 %v701, %v700
    %v727 = vpack.c.b16 %v703, %v702
    %v728 = vpack.c.b16 %v705, %v704
    %v729 = vpack.c.b16 %v707, %v706
    %v730 = vpack.c.b16 %v709, %v708
    %v731 = vpack.c.b16 %v711, %v710
    %v732 = vpack.c.b16 %v713, %v712
    %v733 = vpack.c.b16 %v715, %v714
    %v734 = vpack.c.b16 %v717, %v716
    %v735 = vpack.c.b16 %v719, %v718
    %752 = vmatprep.subr.bf16.mxu0 0
    %753 = vmatpush1.bf16.msra.mxu0 %v720
    %754 = vmatprep.subr.bf16.mxu0 0
    %755 = vmatpush1.bf16.msra.mxu0 %v721
    %756 = vmatprep.subr.bf16.mxu0 0
    %757 = vmatpush1.bf16.msra.mxu0 %v722
    %758 = vmatprep.subr.bf16.mxu0 0
    %759 = vmatpush1.bf16.msra.mxu0 %v723
    %760 = vmatprep.subr.bf16.mxu0 0
    %761 = vmatpush1.bf16.msra.mxu0 %v724
    %762 = vmatprep.subr.bf16.mxu0 0
    %763 = vmatpush1.bf16.msra.mxu0 %v725
    %764 = vmatprep.subr.bf16.mxu0 0
    %765 = vmatpush1.bf16.msra.mxu0 %v726
    %766 = vmatprep.subr.bf16.mxu0 0
    %767 = vmatpush1.bf16.msra.mxu0 %v727
    %768 = vmatprep.subr.bf16.mxu0 0
    %769 = vmatpush1.bf16.msra.mxu0 %v728
    %770 = vmatprep.subr.bf16.mxu0 0
    %771 = vmatpush1.bf16.msra.mxu0 %v729
    %772 = vmatprep.subr.bf16.mxu0 0
    %773 = vmatpush1.bf16.msra.mxu0 %v730
    %774 = vmatprep.subr.bf16.mxu0 0
    %775 = vmatpush1.bf16.msra.mxu0 %v731
    %776 = vmatprep.subr.bf16.mxu0 0
    %777 = vmatpush1.bf16.msra.mxu0 %v732
    %778 = vmatprep.subr.bf16.mxu0 0
    %779 = vmatpush1.bf16.msra.mxu0 %v733
    %780 = vmatprep.subr.bf16.mxu0 0
    %781 = vmatpush1.bf16.msra.mxu0 %v734
    %782 = vmatprep.subr.bf16.mxu0 0
    %783 = vmatpush1.bf16.msra.mxu0 %v735
    %784 = vmatprep.mubr.bf16.mxu0 %v616
    %785 = vmatmul.mubr.bf16.gmra.mrb[0].mxu0 %v615
    %v786 = vpop.f32.mrb[0].mxu0
    %v787 = vadd.f32 %v654, %v786
    %v788 = vpop.f32.mrb[0].mxu0
    %v789 = vpop.f32.mrb[0].mxu0
    %v790 = vadd.f32 %v654, %v789
    %v791 = vpop.f32.mrb[0].mxu0
    %792 = vdwg.mxu0
    %v793 = vpack.c.bf16 %v790, %v787
    %v795 = vunpack.c.l.b16 %v793
    %v796 = vunpack.c.h.b16 %v793
    %v797 = vpack.c.b16 %v795, %v795
    %v798 = vpack.c.b16 %v796, %v796
    %801 = vst [vmem:[%s7] sm:$0xf] %v797
    %802 = vst [vmem:[%s7 + $0x4] sm:$0xf] %v798
    // Predicated region
    $region42: #{dn_forward.1} parent=1 // pred_check
      _
    $region43: #{dn_forward.1} parent=1 // pred_check_branch
      %804 = sbr.rel (0) target = $region45
    $region44: #{dn_forward.1} parent=1 // pred_region
      _
    $region45: #{dn_forward.1} parent=1 // pred_fallthru
      _
    // Predicated region
    $region46: #{dn_forward.1} parent=1 // pred_check
      _
    $region47: #{dn_forward.1} parent=1 // pred_check_branch
      %806 = sbr.rel (0) target = $region49
    $region48: #{dn_forward.1} parent=1 // pred_region
      _
    $region49: #{dn_forward.1} parent=1 // pred_fallthru
      _
    %807 = vsyncpa [#allocation3], 1
    %808 = vsyncpa [#allocation5], 1

</llo_original>
